<compile_context>
chip_gen: v5e
topology: v5e:2x2
jax: 0.10.0
libtpu: 0.0.40
codegen_flags: <defaults>
</compile_context>

<pallas_src>
import jax
import jax.numpy as jnp
from jax import lax
from jax.experimental import pallas as pl
from jax.experimental.pallas import tpu as pltpu

BN_EPS = 1e-5


def _bn_train(y, gamma_row, beta_row):
    """Training-mode BatchNorm1d with gamma fused into the rsqrt scale."""
    mean = jnp.mean(y, axis=0, keepdims=True)
    centered = y - mean
    var = jnp.mean(centered * centered, axis=0, keepdims=True)
    scale = gamma_row * lax.rsqrt(var + BN_EPS)        # (1, F) row op only
    return centered * scale + beta_row


def integrating_kernel(x_ref, z_ref, wpre_t_ref, gpre_ref, bpre_ref,
                       whyp_t_ref, ghyp_ref, bhyp_ref, rep_ref, sum_ref,
                       out_ref):
    # --- pre path: h = ReLU(BN(x @ Wpre^T)); Linear bias dropped (BN cancels it).
    a = jnp.dot(x_ref[...], wpre_t_ref[...], preferred_element_type=jnp.float32)
    h = jnp.maximum(_bn_train(a, gpre_ref[...], bpre_ref[...]), 0.0)       # (B, hidden)

    # --- hypernetwork path (ProxyDecoder): only the kept fc_out*hidden block,
    #     kept in its natural o-major layout (column o*hidden + k == W[b, o, k]).
    f = jnp.dot(z_ref[...], whyp_t_ref[...], preferred_element_type=jnp.float32)
    w_flat = _bn_train(f, ghyp_ref[...], bhyp_ref[...])                    # (B, hidden*fc_out)

    # --- bmm(h.unsqueeze(1), W.transpose(1, 2)) on the MXU:
    #   h_rep[b, o*H + k] = h[b, k]           (Rep is a constant 0/1 matrix)
    #   out[b, o] = sum_k h_rep[b, o*H+k] * w_flat[b, o*H+k]   (Sum is 0/1 segmented-sum)
    # One VPU elementwise multiply between two tiny MXU matmuls; single dense store.
    h_rep = jnp.dot(h, rep_ref[...], preferred_element_type=jnp.float32)   # (B, hidden*fc_out)
    out_ref[...] = jnp.dot(h_rep * w_flat, sum_ref[...],
                           preferred_element_type=jnp.float32)             # (B, fc_out)
    # TODO(synk): at production sizes, tile batch/feature axes with a "parallel"
    # grid dim and use two-pass (sum / sum-sq) BN stats if the batch axis is tiled.


def prepare_params(pre_w, pre_gamma, pre_beta, hyp_w, hyp_gamma, hyp_beta,
                   hidden_dim, fc_output_dim):
    """One-time parameter prep (outside the hot path).

    Slices the hypernetwork parameters to the kept fc_out*hidden block (BN stats
    are per-feature, so this is exact), pre-transposes both Linear weights for
    direct (B,K)x(K,N) MXU matmuls, and builds the constant replication /
    segmented-sum matrices for the in-kernel bmm.  Linear biases are
    intentionally dropped: training-mode BN cancels them exactly.
    """
    keep = fc_output_dim * hidden_dim
    # Rep: (hidden, keep) with Rep[k, o*hidden + k] = 1  -> h_rep[b, j] = h[b, j % hidden]
    rep_mat = jnp.tile(jnp.eye(hidden_dim, dtype=jnp.float32), (1, fc_output_dim))
    # Sum: (keep, fc_out) with Sum[o*hidden + k, o] = 1  -> segmented lane reduction
    sum_mat = jnp.repeat(jnp.eye(fc_output_dim, dtype=jnp.float32), hidden_dim, axis=0)
    return dict(
        pre_w_t=jnp.asarray(pre_w, jnp.float32).T,                         # (input_dim, hidden)
        pre_gamma=jnp.asarray(pre_gamma, jnp.float32).reshape(1, -1),
        pre_beta=jnp.asarray(pre_beta, jnp.float32).reshape(1, -1),
        hyp_w_t=jnp.asarray(hyp_w, jnp.float32)[:keep].T,                  # (hyper_dim, keep)
        hyp_gamma=jnp.asarray(hyp_gamma, jnp.float32)[:keep].reshape(1, -1),
        hyp_beta=jnp.asarray(hyp_beta, jnp.float32)[:keep].reshape(1, -1),
        rep_mat=rep_mat,
        sum_mat=sum_mat,
    )


@jax.jit
def integrating_forward(x, z, params):
    B = x.shape[0]
    hidden = params["pre_gamma"].shape[1]
    keep = params["hyp_gamma"].shape[1]
    fc_out = keep // hidden

    operands = (x, z,
                params["pre_w_t"], params["pre_gamma"], params["pre_beta"],
                params["hyp_w_t"], params["hyp_gamma"], params["hyp_beta"],
                params["rep_mat"], params["sum_mat"])

    out2d = pl.pallas_call(
        integrating_kernel,
        out_shape=jax.ShapeDtypeStruct((B, fc_out), jnp.float32),
        grid=(1,),
        in_specs=[pl.BlockSpec(op.shape, lambda i: (0, 0)) for op in operands],
        out_specs=pl.BlockSpec((B, fc_out), lambda i: (0, 0)),
        compiler_params=pltpu.CompilerParams(dimension_semantics=("arbitrary",)),
    )(*operands)

    # x.unsqueeze(1) in the bmm makes the output (B, 1, fc_out): metadata-only reshape.
    return out2d[:, None, :]


def _reference_forward(x, z, pre_w, pre_b, pre_gamma, pre_beta,
                       hyp_w, hyp_b, hyp_gamma, hyp_beta,
                       hidden_dim, fc_output_dim):
    """Pure-JAX mirror of the PyTorch module (biases included, no pre-slicing)."""
    hi = jax.lax.Precision.HIGHEST

    def bn_train(y, gamma, beta):
        mu = jnp.mean(y, axis=0, keepdims=True)
        var = jnp.mean((y - mu) ** 2, axis=0, keepdims=True)
        return (y - mu) / jnp.sqrt(var + BN_EPS) * gamma + beta

    h = jnp.maximum(bn_train(jnp.matmul(x, pre_w.T, precision=hi) + pre_b,
                             pre_gamma, pre_beta), 0.0)
    flat = bn_train(jnp.matmul(z, hyp_w.T, precision=hi) + hyp_b,
                    hyp_gamma, hyp_beta)
    weight = flat[:, : fc_output_dim * hidden_dim].reshape(-1, fc_output_dim, hidden_dim)
    return jnp.einsum("bk,bok->bo", h, weight, precision=hi)[:, None, :]


if __name__ == "__main__":
    # Small shapes consistent with the module; B > 1 so training-mode BN is defined,
    # and a multiple of 8 so the batch sits on whole f32 sublane tiles.
    B = 8
    input_dim = 16
    hidden_dim = 32                 # == fc_input_dim (required by the bmm)
    fc_output_dim = 8
    hyper_input_dim = 32
    # The hypernetwork emits blocks for several primary layers; only the first
    # (fc_output_dim x hidden_dim) block is consumed by IntegratingNet.
    primary_layer_dims = [(hidden_dim, fc_output_dim), (fc_output_dim, 4)]
    total = sum(di * do for di, do in primary_layer_dims)      # 256 + 32 = 288

    key = jax.random.PRNGKey(0)
    kx, kz, k1, k2, k3, k4, k5, k6, k7, k8 = jax.random.split(key, 10)

    x = jax.random.normal(kx, (B, input_dim), dtype=jnp.float32)
    z = jax.random.normal(kz, (B, hyper_input_dim), dtype=jnp.float32)

    bnd_pre = 1.0 / jnp.sqrt(input_dim)
    pre_w = jax.random.uniform(k1, (hidden_dim, input_dim),
                               minval=-bnd_pre, maxval=bnd_pre, dtype=jnp.float32)
    pre_b = jax.random.uniform(k2, (hidden_dim,),
                               minval=-bnd_pre, maxval=bnd_pre, dtype=jnp.float32)
    pre_gamma = 1.0 + 0.1 * jax.random.normal(k3, (hidden_dim,), dtype=jnp.float32)
    pre_beta = 0.1 * jax.random.normal(k4, (hidden_dim,), dtype=jnp.float32)

    bnd_hyp = 1.0 / jnp.sqrt(hyper_input_dim)
    hyp_w = jax.random.uniform(k5, (total, hyper_input_dim),
                               minval=-bnd_hyp, maxval=bnd_hyp, dtype=jnp.float32)
    hyp_b = jax.random.uniform(k6, (total,),
                               minval=-bnd_hyp, maxval=bnd_hyp, dtype=jnp.float32)
    hyp_gamma = 1.0 + 0.1 * jax.random.normal(k7, (total,), dtype=jnp.float32)
    hyp_beta = 0.1 * jax.random.normal(k8, (total,), dtype=jnp.float32)

    params = prepare_params(pre_w, pre_gamma, pre_beta,
                            hyp_w, hyp_gamma, hyp_beta,
                            hidden_dim, fc_output_dim)

    out = integrating_forward(x, z, params)
    out = jax.block_until_ready(out)

    # Reference includes the Linear biases — the kernel never sees them, which also
    # validates the "bias is cancelled by training-mode BN" simplification.
    ref = _reference_forward(x, z, pre_w, pre_b, pre_gamma, pre_beta,
                             hyp_w, hyp_b, hyp_gamma, hyp_beta,
                             hidden_dim, fc_output_dim)

    assert out.shape == (B, 1, fc_output_dim), out.shape
    max_err = float(jnp.max(jnp.abs(out - ref)))
    assert jnp.allclose(out, ref, atol=2e-3, rtol=2e-3), f"mismatch vs reference: {max_err}"

    print("KERNEL_OK")
</pallas_src>

<mosaic_0001>
module attributes {stable_mosaic.version = 11 : i64} {
  func.func @integrating_kernel(%arg0: i32, %arg1: memref<8x16xf32, #tpu.memory_space<vmem>>, %arg2: memref<8x32xf32, #tpu.memory_space<vmem>>, %arg3: memref<16x32xf32, #tpu.memory_space<vmem>>, %arg4: memref<1x32xf32, #tpu.memory_space<vmem>>, %arg5: memref<1x32xf32, #tpu.memory_space<vmem>>, %arg6: memref<32x256xf32, #tpu.memory_space<vmem>>, %arg7: memref<1x256xf32, #tpu.memory_space<vmem>>, %arg8: memref<1x256xf32, #tpu.memory_space<vmem>>, %arg9: memref<32x256xf32, #tpu.memory_space<vmem>>, %arg10: memref<256x8xf32, #tpu.memory_space<vmem>>, %arg11: memref<8x8xf32, #tpu.memory_space<vmem>>) attributes {dimension_semantics = [#tpu.dimension_semantics<arbitrary>], iteration_bounds = array<i64: 1>, scalar_prefetch = 0 : i64, scratch_operands = 0 : i64, tpu.core_type = #tpu.core_type<tc>, window_params = [{pipeline_mode = #tpu.pipeline_mode<synchronous>, transform_indices = @transform_0, window_bounds = array<i64: 8, 16>}, {pipeline_mode = #tpu.pipeline_mode<synchronous>, transform_indices = @transform_1, window_bounds = array<i64: 8, 32>}, {pipeline_mode = #tpu.pipeline_mode<synchronous>, transform_indices = @transform_2, window_bounds = array<i64: 16, 32>}, {pipeline_mode = #tpu.pipeline_mode<synchronous>, transform_indices = @transform_3, window_bounds = array<i64: 1, 32>}, {pipeline_mode = #tpu.pipeline_mode<synchronous>, transform_indices = @transform_4, window_bounds = array<i64: 1, 32>}, {pipeline_mode = #tpu.pipeline_mode<synchronous>, transform_indices = @transform_5, window_bounds = array<i64: 32, 256>}, {pipeline_mode = #tpu.pipeline_mode<synchronous>, transform_indices = @transform_6, window_bounds = array<i64: 1, 256>}, {pipeline_mode = #tpu.pipeline_mode<synchronous>, transform_indices = @transform_7, window_bounds = array<i64: 1, 256>}, {pipeline_mode = #tpu.pipeline_mode<synchronous>, transform_indices = @transform_8, window_bounds = array<i64: 32, 256>}, {pipeline_mode = #tpu.pipeline_mode<synchronous>, transform_indices = @transform_9, window_bounds = array<i64: 256, 8>}, {pipeline_mode = #tpu.pipeline_mode<synchronous>, transform_indices = @transform_10, window_bounds = array<i64: 8, 8>}]} {
    %c0 = arith.constant 0 : index
    %c0_0 = arith.constant 0 : index
    %0 = vector.load %arg1[%c0, %c0_0] : memref<8x16xf32, #tpu.memory_space<vmem>>, vector<8x16xf32>
    %c0_1 = arith.constant 0 : index
    %c0_2 = arith.constant 0 : index
    %1 = vector.load %arg3[%c0_1, %c0_2] : memref<16x32xf32, #tpu.memory_space<vmem>>, vector<16x32xf32>
    %cst = arith.constant dense<0.000000e+00> : vector<8x32xf32>
    %2 = tpu.matmul %0, %1, %cst {dimension_numbers = #tpu.dot_dimension_numbers<[1], [0], [0], [1], [0, 0, 1, 1], [], []>} : vector<8x16xf32>, vector<16x32xf32>, vector<8x32xf32> -> vector<8x32xf32>
    %c0_3 = arith.constant 0 : index
    %c0_4 = arith.constant 0 : index
    %3 = vector.load %arg4[%c0_3, %c0_4] : memref<1x32xf32, #tpu.memory_space<vmem>>, vector<1x32xf32>
    %c0_5 = arith.constant 0 : index
    %c0_6 = arith.constant 0 : index
    %4 = vector.load %arg5[%c0_5, %c0_6] : memref<1x32xf32, #tpu.memory_space<vmem>>, vector<1x32xf32>
    %cst_7 = arith.constant dense<0.000000e+00> : vector<32xf32>
    %5 = vector.multi_reduction <add>, %2, %cst_7 [0] : vector<8x32xf32> to vector<32xf32>
    %6 = vector.shape_cast %5 : vector<32xf32> to vector<1x32xf32>
    %cst_8 = arith.constant 8.000000e+00 : f32
    %7 = vector.broadcast %cst_8 : f32 to vector<1x32xf32>
    %8 = arith.divf %6, %7 : vector<1x32xf32>
    %9 = vector.broadcast %8 : vector<1x32xf32> to vector<8x32xf32>
    %10 = arith.subf %2, %9 : vector<8x32xf32>
    %11 = arith.mulf %10, %10 : vector<8x32xf32>
    %cst_9 = arith.constant dense<0.000000e+00> : vector<32xf32>
    %12 = vector.multi_reduction <add>, %11, %cst_9 [0] : vector<8x32xf32> to vector<32xf32>
    %13 = vector.shape_cast %12 : vector<32xf32> to vector<1x32xf32>
    %cst_10 = arith.constant 8.000000e+00 : f32
    %14 = vector.broadcast %cst_10 : f32 to vector<1x32xf32>
    %15 = arith.divf %13, %14 : vector<1x32xf32>
    %cst_11 = arith.constant 9.99999974E-6 : f32
    %16 = vector.broadcast %cst_11 : f32 to vector<1x32xf32>
    %17 = arith.addf %15, %16 : vector<1x32xf32>
    %18 = math.rsqrt %17 : vector<1x32xf32>
    %19 = arith.mulf %3, %18 : vector<1x32xf32>
    %20 = vector.broadcast %19 : vector<1x32xf32> to vector<8x32xf32>
    %21 = arith.mulf %10, %20 : vector<8x32xf32>
    %22 = vector.broadcast %4 : vector<1x32xf32> to vector<8x32xf32>
    %23 = arith.addf %21, %22 : vector<8x32xf32>
    %cst_12 = arith.constant 0.000000e+00 : f32
    %24 = vector.broadcast %cst_12 : f32 to vector<8x32xf32>
    %25 = arith.maximumf %23, %24 : vector<8x32xf32>
    %c0_13 = arith.constant 0 : index
    %c0_14 = arith.constant 0 : index
    %26 = vector.load %arg2[%c0_13, %c0_14] : memref<8x32xf32, #tpu.memory_space<vmem>>, vector<8x32xf32>
    %c0_15 = arith.constant 0 : index
    %c0_16 = arith.constant 0 : index
    %27 = vector.load %arg6[%c0_15, %c0_16] : memref<32x256xf32, #tpu.memory_space<vmem>>, vector<32x256xf32>
    %cst_17 = arith.constant dense<0.000000e+00> : vector<8x256xf32>
    %28 = tpu.matmul %26, %27, %cst_17 {dimension_numbers = #tpu.dot_dimension_numbers<[1], [0], [0], [1], [0, 0, 1, 1], [], []>} : vector<8x32xf32>, vector<32x256xf32>, vector<8x256xf32> -> vector<8x256xf32>
    %c0_18 = arith.constant 0 : index
    %c0_19 = arith.constant 0 : index
    %29 = vector.load %arg7[%c0_18, %c0_19] : memref<1x256xf32, #tpu.memory_space<vmem>>, vector<1x256xf32>
    %c0_20 = arith.constant 0 : index
    %c0_21 = arith.constant 0 : index
    %30 = vector.load %arg8[%c0_20, %c0_21] : memref<1x256xf32, #tpu.memory_space<vmem>>, vector<1x256xf32>
    %cst_22 = arith.constant dense<0.000000e+00> : vector<256xf32>
    %31 = vector.multi_reduction <add>, %28, %cst_22 [0] : vector<8x256xf32> to vector<256xf32>
    %32 = vector.shape_cast %31 : vector<256xf32> to vector<1x256xf32>
    %cst_23 = arith.constant 8.000000e+00 : f32
    %33 = vector.broadcast %cst_23 : f32 to vector<1x256xf32>
    %34 = arith.divf %32, %33 : vector<1x256xf32>
    %35 = vector.broadcast %34 : vector<1x256xf32> to vector<8x256xf32>
    %36 = arith.subf %28, %35 : vector<8x256xf32>
    %37 = arith.mulf %36, %36 : vector<8x256xf32>
    %cst_24 = arith.constant dense<0.000000e+00> : vector<256xf32>
    %38 = vector.multi_reduction <add>, %37, %cst_24 [0] : vector<8x256xf32> to vector<256xf32>
    %39 = vector.shape_cast %38 : vector<256xf32> to vector<1x256xf32>
    %cst_25 = arith.constant 8.000000e+00 : f32
    %40 = vector.broadcast %cst_25 : f32 to vector<1x256xf32>
    %41 = arith.divf %39, %40 : vector<1x256xf32>
    %cst_26 = arith.constant 9.99999974E-6 : f32
    %42 = vector.broadcast %cst_26 : f32 to vector<1x256xf32>
    %43 = arith.addf %41, %42 : vector<1x256xf32>
    %44 = math.rsqrt %43 : vector<1x256xf32>
    %45 = arith.mulf %29, %44 : vector<1x256xf32>
    %46 = vector.broadcast %45 : vector<1x256xf32> to vector<8x256xf32>
    %47 = arith.mulf %36, %46 : vector<8x256xf32>
    %48 = vector.broadcast %30 : vector<1x256xf32> to vector<8x256xf32>
    %49 = arith.addf %47, %48 : vector<8x256xf32>
    %c0_27 = arith.constant 0 : index
    %c0_28 = arith.constant 0 : index
    %50 = vector.load %arg9[%c0_27, %c0_28] : memref<32x256xf32, #tpu.memory_space<vmem>>, vector<32x256xf32>
    %cst_29 = arith.constant dense<0.000000e+00> : vector<8x256xf32>
    %51 = tpu.matmul %25, %50, %cst_29 {dimension_numbers = #tpu.dot_dimension_numbers<[1], [0], [0], [1], [0, 0, 1, 1], [], []>} : vector<8x32xf32>, vector<32x256xf32>, vector<8x256xf32> -> vector<8x256xf32>
    %52 = arith.mulf %51, %49 : vector<8x256xf32>
    %c0_30 = arith.constant 0 : index
    %c0_31 = arith.constant 0 : index
    %53 = vector.load %arg10[%c0_30, %c0_31] : memref<256x8xf32, #tpu.memory_space<vmem>>, vector<256x8xf32>
    %cst_32 = arith.constant dense<0.000000e+00> : vector<8x8xf32>
    %54 = tpu.matmul %52, %53, %cst_32 {dimension_numbers = #tpu.dot_dimension_numbers<[1], [0], [0], [1], [0, 0, 1, 1], [], []>} : vector<8x256xf32>, vector<256x8xf32>, vector<8x8xf32> -> vector<8x8xf32>
    %c0_33 = arith.constant 0 : index
    %c0_34 = arith.constant 0 : index
    %55 = vector.load %arg11[%c0_33, %c0_34] : memref<8x8xf32, #tpu.memory_space<vmem>>, vector<8x8xf32>
    tpu.vector_store %arg11[%c0_33, %c0_34], %54 {strides = array<i32>} : memref<8x8xf32, #tpu.memory_space<vmem>>, vector<8x8xf32>,
    return
  }
  func.func @transform_0(%arg0: i32) -> (i32, i32) {
    %c0_i32 = arith.constant 0 : i32
    %c0_i32_0 = arith.constant 0 : i32
    %c0_i32_1 = arith.constant 0 : i32
    return %c0_i32, %c0_i32_0 : i32, i32
  }
  func.func @transform_1(%arg0: i32) -> (i32, i32) {
    %c0_i32 = arith.constant 0 : i32
    %c0_i32_0 = arith.constant 0 : i32
    %c0_i32_1 = arith.constant 0 : i32
    return %c0_i32, %c0_i32_0 : i32, i32
  }
  func.func @transform_2(%arg0: i32) -> (i32, i32) {
    %c0_i32 = arith.constant 0 : i32
    %c0_i32_0 = arith.constant 0 : i32
    %c0_i32_1 = arith.constant 0 : i32
    return %c0_i32, %c0_i32_0 : i32, i32
  }
  func.func @transform_3(%arg0: i32) -> (i32, i32) {
    %c0_i32 = arith.constant 0 : i32
    %c0_i32_0 = arith.constant 0 : i32
    %c0_i32_1 = arith.constant 0 : i32
    return %c0_i32, %c0_i32_0 : i32, i32
  }
  func.func @transform_4(%arg0: i32) -> (i32, i32) {
    %c0_i32 = arith.constant 0 : i32
    %c0_i32_0 = arith.constant 0 : i32
    %c0_i32_1 = arith.constant 0 : i32
    return %c0_i32, %c0_i32_0 : i32, i32
  }
  func.func @transform_5(%arg0: i32) -> (i32, i32) {
    %c0_i32 = arith.constant 0 : i32
    %c0_i32_0 = arith.constant 0 : i32
    %c0_i32_1 = arith.constant 0 : i32
    return %c0_i32, %c0_i32_0 : i32, i32
  }
  func.func @transform_6(%arg0: i32) -> (i32, i32) {
    %c0_i32 = arith.constant 0 : i32
    %c0_i32_0 = arith.constant 0 : i32
    %c0_i32_1 = arith.constant 0 : i32
    return %c0_i32, %c0_i32_0 : i32, i32
  }
  func.func @transform_7(%arg0: i32) -> (i32, i32) {
    %c0_i32 = arith.constant 0 : i32
    %c0_i32_0 = arith.constant 0 : i32
    %c0_i32_1 = arith.constant 0 : i32
    return %c0_i32, %c0_i32_0 : i32, i32
  }
  func.func @transform_8(%arg0: i32) -> (i32, i32) {
    %c0_i32 = arith.constant 0 : i32
    %c0_i32_0 = arith.constant 0 : i32
    %c0_i32_1 = arith.constant 0 : i32
    return %c0_i32, %c0_i32_0 : i32, i32
  }
  func.func @transform_9(%arg0: i32) -> (i32, i32) {
    %c0_i32 = arith.constant 0 : i32
    %c0_i32_0 = arith.constant 0 : i32
    %c0_i32_1 = arith.constant 0 : i32
    return %c0_i32, %c0_i32_0 : i32, i32
  }
  func.func @transform_10(%arg0: i32) -> (i32, i32) {
    %c0_i32 = arith.constant 0 : i32
    %c0_i32_0 = arith.constant 0 : i32
    %c0_i32_1 = arith.constant 0 : i32
    return %c0_i32, %c0_i32_0 : i32, i32
  }
}

</mosaic_0001>

<llo_original>
// kernel: integrating_forward.1
$region0: #{integrating_forward.1}
  #allocation0 [shape = 'u32[]', space=smem, size = 0x4, offset = 0x4, fixed_abs, tag = 'smem constant byte address 0x4 - core index']
  #allocation1 [shape = 'u32[72,128]{1,0:T(1,128)}', space=vmem, size = 0x9000, scoped, tag = 'internal scratch']
  %s0 = inlined_call_operand.vmem [shape: f32[8,16], index: 0, kind: input, shape index: {}]
  %s1 = inlined_call_operand.vmem [shape: f32[8,32], index: 1, kind: input, shape index: {}]
  %s2 = inlined_call_operand.vmem [shape: f32[16,32], index: 2, kind: input, shape index: {}]
  %s3 = inlined_call_operand.vmem [shape: f32[1,32], index: 3, kind: input, shape index: {}]
  %s4 = inlined_call_operand.vmem [shape: f32[1,32], index: 4, kind: input, shape index: {}]
  %s5 = inlined_call_operand.vmem [shape: f32[32,256], index: 5, kind: input, shape index: {}]
  %s6 = inlined_call_operand.vmem [shape: f32[1,256], index: 6, kind: input, shape index: {}]
  %s7 = inlined_call_operand.vmem [shape: f32[1,256], index: 7, kind: input, shape index: {}]
  %s8 = inlined_call_operand.vmem [shape: f32[32,256], index: 8, kind: input, shape index: {}]
  %s9 = inlined_call_operand.vmem [shape: f32[256,8], index: 9, kind: input, shape index: {}]
  %s10 = inlined_call_operand.hbm [shape: f32[8,8], index: 10, kind: output, shape index: {}]
  %s11 = sld [smem:[#allocation0]]
  $region50: #{integrating_forward.1} parent=0
    _
  %s13 = ssub.s32 1, %s11
  %s14 = scalar_select 0, %s13, %s11
  $region1: #{integrating_forward.1} parent=0
    #allocation2 [shape = 'u8[4096]{0}', space=vmem, size = 0x1000, scoped, tag = 'output window, operand 0, single buffered']
    #allocation3 [shape = 's32[1]{0}', space=sflag, size = 0x4, scoped, tag = 'scoped memory for integrating_forward.1']
    %15 = vsyncpa [#allocation3], 0
    // Predicated region
    $region2: #{integrating_forward.1} parent=1 // pred_check
      _
    $region3: #{integrating_forward.1} parent=1 // pred_check_branch
      %17 = sbr.rel (0) target = $region5
    $region4: #{integrating_forward.1} parent=1 // pred_region
      _
    $region5: #{integrating_forward.1} parent=1 // pred_fallthru
      _
    // Predicated region
    $region6: #{integrating_forward.1} parent=1 // pred_check
      _
    $region7: #{integrating_forward.1} parent=1 // pred_check_branch
      %19 = sbr.rel (0) target = $region9
    $region8: #{integrating_forward.1} parent=1 // pred_region
      _
    $region9: #{integrating_forward.1} parent=1 // pred_fallthru
      _
    // Predicated region
    $region10: #{integrating_forward.1} parent=1 // pred_check
      _
    $region11: #{integrating_forward.1} parent=1 // pred_check_branch
      %21 = sbr.rel (0) target = $region13
    $region12: #{integrating_forward.1} parent=1 // pred_region
      _
    $region13: #{integrating_forward.1} parent=1 // pred_fallthru
      _
    // Predicated region
    $region14: #{integrating_forward.1} parent=1 // pred_check
      _
    $region15: #{integrating_forward.1} parent=1 // pred_check_branch
      %23 = sbr.rel (0) target = $region17
    $region16: #{integrating_forward.1} parent=1 // pred_region
      _
    $region17: #{integrating_forward.1} parent=1 // pred_fallthru
      _
    // Predicated region
    $region18: #{integrating_forward.1} parent=1 // pred_check
      _
    $region19: #{integrating_forward.1} parent=1 // pred_check_branch
      %25 = sbr.rel (0) target = $region21
    $region20: #{integrating_forward.1} parent=1 // pred_region
      _
    $region21: #{integrating_forward.1} parent=1 // pred_fallthru
      _
    // Predicated region
    $region22: #{integrating_forward.1} parent=1 // pred_check
      _
    $region23: #{integrating_forward.1} parent=1 // pred_check_branch
      %27 = sbr.rel (0) target = $region25
    $region24: #{integrating_forward.1} parent=1 // pred_region
      _
    $region25: #{integrating_forward.1} parent=1 // pred_fallthru
      _
    // Predicated region
    $region26: #{integrating_forward.1} parent=1 // pred_check
      _
    $region27: #{integrating_forward.1} parent=1 // pred_check_branch
      %29 = sbr.rel (0) target = $region29
    $region28: #{integrating_forward.1} parent=1 // pred_region
      _
    $region29: #{integrating_forward.1} parent=1 // pred_fallthru
      _
    // Predicated region
    $region30: #{integrating_forward.1} parent=1 // pred_check
      _
    $region31: #{integrating_forward.1} parent=1 // pred_check_branch
      %31 = sbr.rel (0) target = $region33
    $region32: #{integrating_forward.1} parent=1 // pred_region
      _
    $region33: #{integrating_forward.1} parent=1 // pred_fallthru
      _
    // Predicated region
    $region34: #{integrating_forward.1} parent=1 // pred_check
      _
    $region35: #{integrating_forward.1} parent=1 // pred_check_branch
      %33 = sbr.rel (0) target = $region37
    $region36: #{integrating_forward.1} parent=1 // pred_region
      _
    $region37: #{integrating_forward.1} parent=1 // pred_fallthru
      _
    // Predicated region
    $region38: #{integrating_forward.1} parent=1 // pred_check
      _
    $region39: #{integrating_forward.1} parent=1 // pred_check_branch
      %35 = sbr.rel (0) target = $region41
    $region40: #{integrating_forward.1} parent=1 // pred_region
      _
    $region41: #{integrating_forward.1} parent=1 // pred_fallthru
      _
    %v36 = vld [vmem:[%s0] sm:$0xff]
    %v37 = vld [vmem:[%s2] sm:$0xff]
    %v38 = vld [vmem:[%s2 + $0x8] sm:$0xff]
    %vm39 = vcmask 130048
    %v41 = vsel %vm39, %v36, 0
    %43 = vmatpush.msra.mxu0 0.0
    %44 = vmatpush.msra.mxu0 0.0
    %45 = vmatpush.msra.mxu0 0.0
    %46 = vmatpush.msra.mxu0 0.0
    %47 = vmatpush.msra.mxu0 0.0
    %48 = vmatpush.msra.mxu0 0.0
    %49 = vmatpush.msra.mxu0 0.0
    %50 = vmatpush.msra.mxu0 0.0
    %51 = vmatpush.msra.mxu0 0.0
    %52 = vmatpush.msra.mxu0 0.0
    %53 = vmatpush.msra.mxu0 0.0
    %54 = vmatpush.msra.mxu0 0.0
    %55 = vmatpush.msra.mxu0 0.0
    %56 = vmatpush.msra.mxu0 0.0
    %57 = vmatpush.msra.mxu0 %v38
    %58 = vmatpush.msra.mxu0 %v37
    %59 = vmatmul.f32.gmra.mxu0 %v41
    %v60 = vpop.f32.mrf.mxu0
    %v61 = vadd.f32 0.0, %v60
    %62 = vdwg.mxu0
    %v63 = vld [vmem:[%s3] sm:$0x1]
    %v64 = vld [vmem:[%s4] sm:$0x1]
    %vm65 = vcmask 261120
    %v66 = vsel %vm65, %v61, 0.0
    %v67 = vrot.slane %v66, 4
    %v68 = vadd.f32 %v66, %v67
    %v69 = vrot.slane %v68, 2
    %v70 = vadd.f32 %v68, %v69
    %v71 = vrot.slane %v70, 1
    %v72 = vadd.f32 %v70, %v71
    %v73 = vrcp.pop 8.0
    %v74 = vmul.f32 8.0, %v73
    %v75 = vsub.f32 1.0, %v74
    %v76 = vmul.f32 %v73, %v75
    %v77 = vadd.f32 %v73, %v76
    %vm78 = vweird.f32 %v73
    %v79 = vsel %vm78, %v73, %v77
    %v80 = vmul.f32 %v72, %v79
    %v81 = vsub.f32 %v61, %v80
    %v82 = vmul.f32 %v81, %v81
    %v83 = vsel %vm65, %v82, 0.0
    %v84 = vrot.slane %v83, 4
    %v85 = vadd.f32 %v83, %v84
    %v86 = vrot.slane %v85, 2
    %v87 = vadd.f32 %v85, %v86
    %v88 = vrot.slane %v87, 1
    %v89 = vadd.f32 %v87, %v88
    %v90 = vmul.f32 %v89, %v79
    %v91 = vadd.f32 %v90, 1e-05
    %v92 = vrsqrt.pop %v91
    %v93 = vmul.f32 %v92, %v91
    %v94 = vmul.f32 %v93, %v92
    %v95 = vmul.f32 0.5, %v94
    %v96 = vsub.f32 1.5, %v95
    %v97 = vmul.f32 %v92, %v96
    %vm98 = vweird.f32 %v91
    %vm99 = vweird.f32 %v92
    %vm100 = vmor %vm98, %vm99
    %v101 = vsel %vm100, %v92, %v97
    %v102 = vmul.f32 %v63, %v101
    %v104 = vperm.slane %v102, 0
    %v106 = vmul.f32 %v81, %v104
    %v108 = vperm.slane %v64, 0
    %v110 = vadd.f32 %v106, %v108
    %v111 = vmax.f32 %v110, 0.0
    %v112 = vld [vmem:[%s1] sm:$0xff]
    %v113 = vld [vmem:[%s5] sm:$0xff]
    %v114 = vld [vmem:[%s5 + $0x8] sm:$0xff]
    %v115 = vld [vmem:[%s5 + $0x10] sm:$0xff]
    %v116 = vld [vmem:[%s5 + $0x18] sm:$0xff]
    %v117 = vld [vmem:[%s5 + $0x20] sm:$0xff]
    %v118 = vld [vmem:[%s5 + $0x28] sm:$0xff]
    %v119 = vld [vmem:[%s5 + $0x30] sm:$0xff]
    %v120 = vld [vmem:[%s5 + $0x38] sm:$0xff]
    %v122 = vsel %vm65, %v112, 0
    %124 = vmatpush.msra.mxu0 0.0
    %125 = vmatpush.msra.mxu0 0.0
    %126 = vmatpush.msra.mxu0 0.0
    %127 = vmatpush.msra.mxu0 0.0
    %128 = vmatpush.msra.mxu0 0.0
    %129 = vmatpush.msra.mxu0 0.0
    %130 = vmatpush.msra.mxu0 0.0
    %131 = vmatpush.msra.mxu0 0.0
    %132 = vmatpush.msra.mxu0 0.0
    %133 = vmatpush.msra.mxu0 0.0
    %134 = vmatpush.msra.mxu0 0.0
    %135 = vmatpush.msra.mxu0 0.0
    %136 = vmatpush.msra.mxu0 %v119
    %137 = vmatpush.msra.mxu0 %v117
    %138 = vmatpush.msra.mxu0 %v115
    %139 = vmatpush.msra.mxu0 %v113
    %140 = vmatmul.f32.gmra.mxu0 %v122
    %v141 = vpop.f32.mrf.mxu0
    %v142 = vadd.f32 0.0, %v141
    %143 = vdwg.mxu0
    %144 = vmatpush.msra.mxu0 0.0
    %145 = vmatpush.msra.mxu0 0.0
    %146 = vmatpush.msra.mxu0 0.0
    %147 = vmatpush.msra.mxu0 0.0
    %148 = vmatpush.msra.mxu0 0.0
    %149 = vmatpush.msra.mxu0 0.0
    %150 = vmatpush.msra.mxu0 0.0
    %151 = vmatpush.msra.mxu0 0.0
    %152 = vmatpush.msra.mxu0 0.0
    %153 = vmatpush.msra.mxu0 0.0
    %154 = vmatpush.msra.mxu0 0.0
    %155 = vmatpush.msra.mxu0 0.0
    %156 = vmatpush.msra.mxu0 %v120
    %157 = vmatpush.msra.mxu0 %v118
    %158 = vmatpush.msra.mxu0 %v116
    %159 = vmatpush.msra.mxu0 %v114
    %160 = vmatmul.f32.gmra.mxu0 %v122
    %v161 = vpop.f32.mrf.mxu0
    %v162 = vadd.f32 0.0, %v161
    %163 = vdwg.mxu0
    %v164 = vld [vmem:[%s6] sm:$0x3]
    %v165 = vld [vmem:[%s7] sm:$0x3]
    %v166 = vrot.slane %v142, 4
    %v167 = vadd.f32 %v142, %v166
    %v168 = vrot.slane %v167, 2
    %v169 = vadd.f32 %v167, %v168
    %v170 = vrot.slane %v169, 1
    %v171 = vadd.f32 %v169, %v170
    %v172 = vrot.slane %v162, 4
    %v173 = vadd.f32 %v162, %v172
    %v174 = vrot.slane %v173, 2
    %v175 = vadd.f32 %v173, %v174
    %v176 = vrot.slane %v175, 1
    %v177 = vadd.f32 %v175, %v176
    %v178 = vmul.f32 %v171, %v79
    %v179 = vmul.f32 %v177, %v79
    %v180 = vsub.f32 %v142, %v178
    %v181 = vsub.f32 %v162, %v179
    %v182 = vmul.f32 %v180, %v180
    %v183 = vmul.f32 %v181, %v181
    %v184 = vrot.slane %v182, 4
    %v185 = vadd.f32 %v182, %v184
    %v186 = vrot.slane %v185, 2
    %v187 = vadd.f32 %v185, %v186
    %v188 = vrot.slane %v187, 1
    %v189 = vadd.f32 %v187, %v188
    %v190 = vrot.slane %v183, 4
    %v191 = vadd.f32 %v183, %v190
    %v192 = vrot.slane %v191, 2
    %v193 = vadd.f32 %v191, %v192
    %v194 = vrot.slane %v193, 1
    %v195 = vadd.f32 %v193, %v194
    %v196 = vmul.f32 %v189, %v79
    %v197 = vmul.f32 %v195, %v79
    %v198 = vadd.f32 %v196, 1e-05
    %v199 = vadd.f32 %v197, 1e-05
    %v200 = vrsqrt.pop %v198
    %v201 = vmul.f32 %v200, %v198
    %v202 = vmul.f32 %v201, %v200
    %v203 = vmul.f32 0.5, %v202
    %v204 = vsub.f32 1.5, %v203
    %v205 = vmul.f32 %v200, %v204
    %vm206 = vweird.f32 %v198
    %vm207 = vweird.f32 %v200
    %vm208 = vmor %vm206, %vm207
    %v209 = vsel %vm208, %v200, %v205
    %v210 = vrsqrt.pop %v199
    %v211 = vmul.f32 %v210, %v199
    %v212 = vmul.f32 %v211, %v210
    %v213 = vmul.f32 0.5, %v212
    %v214 = vsub.f32 1.5, %v213
    %v215 = vmul.f32 %v210, %v214
    %vm216 = vweird.f32 %v199
    %vm217 = vweird.f32 %v210
    %vm218 = vmor %vm216, %vm217
    %v219 = vsel %vm218, %v210, %v215
    %v222 = vrot.slane %v219, 7
    %vm223 = vcmask 1040384
    %v224 = vsel %vm223, %v209, %v222
    %v226 = vmul.f32 %v164, %v224
    %v228 = vperm.slane %v226, 0
    %v229 = vperm.slane %v226, 1
    %v232 = vmul.f32 %v180, %v228
    %v233 = vmul.f32 %v181, %v229
    %v235 = vperm.slane %v165, 0
    %v236 = vperm.slane %v165, 1
    %v239 = vadd.f32 %v232, %v235
    %v240 = vadd.f32 %v233, %v236
    %v241 = vld [vmem:[%s8] sm:$0xff]
    %v242 = vld [vmem:[%s8 + $0x8] sm:$0xff]
    %v243 = vld [vmem:[%s8 + $0x10] sm:$0xff]
    %v244 = vld [vmem:[%s8 + $0x18] sm:$0xff]
    %v245 = vld [vmem:[%s8 + $0x20] sm:$0xff]
    %v246 = vld [vmem:[%s8 + $0x28] sm:$0xff]
    %v247 = vld [vmem:[%s8 + $0x30] sm:$0xff]
    %v248 = vld [vmem:[%s8 + $0x38] sm:$0xff]
    %v250 = vsel %vm65, %v111, 0
    %252 = vmatpush.msra.mxu0 0.0
    %253 = vmatpush.msra.mxu0 0.0
    %254 = vmatpush.msra.mxu0 0.0
    %255 = vmatpush.msra.mxu0 0.0
    %256 = vmatpush.msra.mxu0 0.0
    %257 = vmatpush.msra.mxu0 0.0
    %258 = vmatpush.msra.mxu0 0.0
    %259 = vmatpush.msra.mxu0 0.0
    %260 = vmatpush.msra.mxu0 0.0
    %261 = vmatpush.msra.mxu0 0.0
    %262 = vmatpush.msra.mxu0 0.0
    %263 = vmatpush.msra.mxu0 0.0
    %264 = vmatpush.msra.mxu0 %v247
    %265 = vmatpush.msra.mxu0 %v245
    %266 = vmatpush.msra.mxu0 %v243
    %267 = vmatpush.msra.mxu0 %v241
    %268 = vmatmul.f32.gmra.mxu0 %v250
    %v269 = vpop.f32.mrf.mxu0
    %v270 = vadd.f32 0.0, %v269
    %271 = vdwg.mxu0
    %272 = vmatpush.msra.mxu0 0.0
    %273 = vmatpush.msra.mxu0 0.0
    %274 = vmatpush.msra.mxu0 0.0
    %275 = vmatpush.msra.mxu0 0.0
    %276 = vmatpush.msra.mxu0 0.0
    %277 = vmatpush.msra.mxu0 0.0
    %278 = vmatpush.msra.mxu0 0.0
    %279 = vmatpush.msra.mxu0 0.0
    %280 = vmatpush.msra.mxu0 0.0
    %281 = vmatpush.msra.mxu0 0.0
    %282 = vmatpush.msra.mxu0 0.0
    %283 = vmatpush.msra.mxu0 0.0
    %284 = vmatpush.msra.mxu0 %v248
    %285 = vmatpush.msra.mxu0 %v246
    %286 = vmatpush.msra.mxu0 %v244
    %287 = vmatpush.msra.mxu0 %v242
    %288 = vmatmul.f32.gmra.mxu0 %v250
    %v289 = vpop.f32.mrf.mxu0
    %v290 = vadd.f32 0.0, %v289
    %291 = vdwg.mxu0
    %v292 = vmul.f32 %v270, %v239
    %v293 = vmul.f32 %v290, %v240
    %v294 = vld [vmem:[%s9] sm:$0xff]
    %v295 = vld [vmem:[%s9 + $0x8] sm:$0xff]
    %v296 = vld [vmem:[%s9 + $0x10] sm:$0xff]
    %v297 = vld [vmem:[%s9 + $0x18] sm:$0xff]
    %v298 = vld [vmem:[%s9 + $0x20] sm:$0xff]
    %v299 = vld [vmem:[%s9 + $0x28] sm:$0xff]
    %v300 = vld [vmem:[%s9 + $0x30] sm:$0xff]
    %v301 = vld [vmem:[%s9 + $0x38] sm:$0xff]
    %v302 = vld [vmem:[%s9 + $0x40] sm:$0xff]
    %v303 = vld [vmem:[%s9 + $0x48] sm:$0xff]
    %v304 = vld [vmem:[%s9 + $0x50] sm:$0xff]
    %v305 = vld [vmem:[%s9 + $0x58] sm:$0xff]
    %v306 = vld [vmem:[%s9 + $0x60] sm:$0xff]
    %v307 = vld [vmem:[%s9 + $0x68] sm:$0xff]
    %v308 = vld [vmem:[%s9 + $0x70] sm:$0xff]
    %v309 = vld [vmem:[%s9 + $0x78] sm:$0xff]
    %v310 = vld [vmem:[%s9 + $0x80] sm:$0xff]
    %v311 = vld [vmem:[%s9 + $0x88] sm:$0xff]
    %v312 = vld [vmem:[%s9 + $0x90] sm:$0xff]
    %v313 = vld [vmem:[%s9 + $0x98] sm:$0xff]
    %v314 = vld [vmem:[%s9 + $0xa0] sm:$0xff]
    %v315 = vld [vmem:[%s9 + $0xa8] sm:$0xff]
    %v316 = vld [vmem:[%s9 + $0xb0] sm:$0xff]
    %v317 = vld [vmem:[%s9 + $0xb8] sm:$0xff]
    %v318 = vld [vmem:[%s9 + $0xc0] sm:$0xff]
    %v319 = vld [vmem:[%s9 + $0xc8] sm:$0xff]
    %v320 = vld [vmem:[%s9 + $0xd0] sm:$0xff]
    %v321 = vld [vmem:[%s9 + $0xd8] sm:$0xff]
    %v322 = vld [vmem:[%s9 + $0xe0] sm:$0xff]
    %v323 = vld [vmem:[%s9 + $0xe8] sm:$0xff]
    %v324 = vld [vmem:[%s9 + $0xf0] sm:$0xff]
    %v325 = vld [vmem:[%s9 + $0xf8] sm:$0xff]
    %326 = vmatpush.msra.mxu0 %v309
    %327 = vmatpush.msra.mxu0 %v308
    %328 = vmatpush.msra.mxu0 %v307
    %329 = vmatpush.msra.mxu0 %v306
    %330 = vmatpush.msra.mxu0 %v305
    %331 = vmatpush.msra.mxu0 %v304
    %332 = vmatpush.msra.mxu0 %v303
    %333 = vmatpush.msra.mxu0 %v302
    %334 = vmatpush.msra.mxu0 %v301
    %335 = vmatpush.msra.mxu0 %v300
    %336 = vmatpush.msra.mxu0 %v299
    %337 = vmatpush.msra.mxu0 %v298
    %338 = vmatpush.msra.mxu0 %v297
    %339 = vmatpush.msra.mxu0 %v296
    %340 = vmatpush.msra.mxu0 %v295
    %341 = vmatpush.msra.mxu0 %v294
    %342 = vmatmul.f32.gmra.mxu0 %v292
    %v343 = vpop.f32.mrf.mxu0
    %v344 = vadd.f32 0.0, %v343
    %345 = vdwg.mxu0
    %346 = vmatpush.msra.mxu0 %v325
    %347 = vmatpush.msra.mxu0 %v324
    %348 = vmatpush.msra.mxu0 %v323
    %349 = vmatpush.msra.mxu0 %v322
    %350 = vmatpush.msra.mxu0 %v321
    %351 = vmatpush.msra.mxu0 %v320
    %352 = vmatpush.msra.mxu0 %v319
    %353 = vmatpush.msra.mxu0 %v318
    %354 = vmatpush.msra.mxu0 %v317
    %355 = vmatpush.msra.mxu0 %v316
    %356 = vmatpush.msra.mxu0 %v315
    %357 = vmatpush.msra.mxu0 %v314
    %358 = vmatpush.msra.mxu0 %v313
    %359 = vmatpush.msra.mxu0 %v312
    %360 = vmatpush.msra.mxu0 %v311
    %361 = vmatpush.msra.mxu0 %v310
    %362 = vmatmul.f32.gmra.mxu0 %v293
    %v363 = vpop.f32.mrf.mxu0
    %v364 = vadd.f32 %v344, %v363
    %365 = vdwg.mxu0
    %vm366 = vcmask 64512
    %367 = vst.msk [vmem:[#allocation2] sm:$0xff] %vm366, %v364
    // Predicated region
    $region42: #{integrating_forward.1} parent=1 // pred_check
      _
    $region43: #{integrating_forward.1} parent=1 // pred_check_branch
      %369 = sbr.rel (0) target = $region45
    $region44: #{integrating_forward.1} parent=1 // pred_region
      %371 = vsyncadd [#allocation3], 0
      %s373 = sshll.u32 [#allocation2], 4
      %s374 = int_to_ptr.vmem [resolvable:$true] %s373
      %s375 = sshll.u32 %s10, 4
      %s376 = int_to_ptr.hbm [resolvable:$true] %s375
      %378 = dma.vmem_to_hbm [thread:$0]  %s374, 128, %s376, [#allocation3]
    $region45: #{integrating_forward.1} parent=1 // pred_fallthru
      _
    // Predicated region
    $region46: #{integrating_forward.1} parent=1 // pred_check
      _
    $region47: #{integrating_forward.1} parent=1 // pred_check_branch
      %380 = sbr.rel (0) target = $region49
    $region48: #{integrating_forward.1} parent=1 // pred_region
      %382 = dma.done [#allocation3], 128
    $region49: #{integrating_forward.1} parent=1 // pred_fallthru
      _
    %383 = vsyncpa [#allocation3], 1

</llo_original>
